<compile_context>
chip_gen: v6e
topology: v6e:2x2x1
jax: 0.10.0
libtpu: 0.0.40
codegen_flags: <defaults>
</compile_context>

<pallas_src>
import functools

import jax
import jax.numpy as jnp
from jax.experimental import pallas as pl
from jax.experimental.pallas import tpu as pltpu


def _round_up(x, m):
    return ((x + m - 1) // m) * m


# --------------------------- fused kernel -----------------------------------
def mlp_head_fused_kernel(x_ref, w1_ref, gamma_ref, beta_ref, w2_ref, b2_ref,
                          o_ref, s_ref, ss_ref, scale_ref, shift_ref,
                          *, n_valid, eps):
    p = pl.program_id(0)   # 0 = batch-stats pass, 1 = apply pass
    i = pl.program_id(1)   # tile index over the batch dimension

    # ---- phase 0, first tile: zero the persistent accumulators -------------
    @pl.when((p == 0) & (i == 0))
    def _init():
        s_ref[...] = jnp.zeros_like(s_ref)
        ss_ref[...] = jnp.zeros_like(ss_ref)

    # ---- phase 0: accumulate batch statistics of g = x @ W1 ----------------
    @pl.when(p == 0)
    def _stats():
        g = jnp.dot(x_ref[...], w1_ref[...], preferred_element_type=jnp.float32)
        # zero-padded rows (x == 0, no bias added) contribute exactly 0.
        s_ref[...] += jnp.sum(g, axis=0, keepdims=True)
        ss_ref[...] += jnp.sum(g * g, axis=0, keepdims=True)

    # ---- phase 1, first tile: fold batch stats into a BN scale / shift -----
    @pl.when((p == 1) & (i == 0))
    def _finalize():
        inv_n = 1.0 / n_valid
        mean_g = s_ref[...] * inv_n
        var = jnp.maximum(ss_ref[...] * inv_n - mean_g * mean_g, 0.0)
        scale = gamma_ref[...] * jax.lax.rsqrt(var + eps)
        scale_ref[...] = scale
        # b1 cancels through training-mode BN: (g + b1) - mean(g + b1) = g - mean(g)
        shift_ref[...] = beta_ref[...] - mean_g * scale

    # ---- phase 1: BN(apply) -> ReLU -> Linear2 -> L2 normalize -------------
    @pl.when(p == 1)
    def _apply():
        g = jnp.dot(x_ref[...], w1_ref[...], preferred_element_type=jnp.float32)
        hr = jnp.maximum(g * scale_ref[...] + shift_ref[...], 0.0)
        z = jnp.dot(hr.astype(jnp.bfloat16), w2_ref[...],
                    preferred_element_type=jnp.float32) + b2_ref[...]
        # F.normalize(z, p=2, dim=1): clamp at 1e-24 preserves max(||z||,1e-12).
        sumsq = jnp.sum(z * z, axis=1, keepdims=True)
        o_ref[...] = (z * jax.lax.rsqrt(jnp.maximum(sumsq, 1e-24))).astype(o_ref.dtype)


# --------------------------- wrapper -----------------------------------------
def mlp_head_forward(x, w1, b1, gamma, beta, w2, b2, *,
                     tile_n=2048, eps=1e-5, out_dtype=jnp.bfloat16):
    """x: (N, in_channels) f32 -> (N, low_dim) out_dtype (L2-normalized rows)."""
    del b1  # exactly cancelled by training-mode BatchNorm (see kernel comment)
    n, c = x.shape
    hdim = w1.shape[1]
    d = w2.shape[1]

    # ---- lane-dense hidden dim: zero-pad H to a multiple of 128 ------------
    # gamma/beta pads are 0, so padded channels stay exactly 0 through
    # BN -> ReLU -> Linear2 (W2 pad rows are 0 too).
    hp = _round_up(hdim, 128)
    if hp != hdim:
        w1 = jnp.pad(w1, ((0, 0), (0, hp - hdim)))
        gamma = jnp.pad(gamma, ((0, 0), (0, hp - hdim)))
        beta = jnp.pad(beta, ((0, 0), (0, hp - hdim)))
        w2 = jnp.pad(w2, ((0, hp - hdim), (0, 0)))

    # ---- batch tiling: multiples of 16 (bf16 sublane packing) ---------------
    tile_n = min(tile_n, _round_up(n, 16))
    n_pad = _round_up(n, tile_n)
    n_tiles = n_pad // tile_n

    # bf16 activations / weights in HBM -> half the traffic, MXU-native dtype.
    x_bf = x.astype(jnp.bfloat16)
    if n_pad != n:
        x_bf = jnp.pad(x_bf, ((0, n_pad - n), (0, 0)))
    w1_bf = w1.astype(jnp.bfloat16)
    w2_bf = w2.astype(jnp.bfloat16)

    x_spec = pl.BlockSpec((tile_n, c), lambda p, i: (i, 0))
    w1_spec = pl.BlockSpec((c, hp), lambda p, i: (0, 0))        # VMEM-resident
    row_h_spec = pl.BlockSpec((1, hp), lambda p, i: (0, 0))     # gamma / beta
    w2_spec = pl.BlockSpec((hp, d), lambda p, i: (0, 0))
    row_d_spec = pl.BlockSpec((1, d), lambda p, i: (0, 0))      # b2
    # i*p keeps the output block index constant (0) through the stats phase, so
    # no output buffer is ever flushed before phase 1 writes the real data.
    out_spec = pl.BlockSpec((tile_n, d), lambda p, i: (i * p, 0))

    kernel = functools.partial(mlp_head_fused_kernel, n_valid=n, eps=eps)

    out = pl.pallas_call(
        kernel,
        out_shape=jax.ShapeDtypeStruct((n_pad, d), out_dtype),
        grid_spec=pltpu.PrefetchScalarGridSpec(
            num_scalar_prefetch=0,
            grid=(2, n_tiles),
            in_specs=[x_spec, w1_spec, row_h_spec, row_h_spec, w2_spec,
                      row_d_spec],
            out_specs=out_spec,
            scratch_shapes=[pltpu.VMEM((1, hp), jnp.float32),   # sum(g)
                            pltpu.VMEM((1, hp), jnp.float32),   # sum(g^2)
                            pltpu.VMEM((1, hp), jnp.float32),   # BN scale
                            pltpu.VMEM((1, hp), jnp.float32)]), # BN shift
        compiler_params=pltpu.CompilerParams(
            # phase axis and the N reduction/apply axis are both order-dependent
            # (scratch accumulators + in-kernel finalize), so "arbitrary".
            dimension_semantics=("arbitrary", "arbitrary"),
            # 32 MiB scoped VMEM: safe on v5e/v6e (128 MiB) and v7x (64 MiB);
            # even at tile_n=2048 the tiles + f32 temporaries are ~4 MiB.
            vmem_limit_bytes=32 * 1024 * 1024),
    )(x_bf, w1_bf, gamma, beta, w2_bf, b2)

    return out[:n]


# --------------------------- params / reference ------------------------------
def init_params(key, in_channels, mlp_hidden_size, low_dim):
    """Deterministic synthetic params (PyTorch-like uniform fan-in init)."""
    k1, k2, k3, k4 = jax.random.split(key, 4)
    lim1 = 1.0 / jnp.sqrt(in_channels)
    lim2 = 1.0 / jnp.sqrt(mlp_hidden_size)
    # weights stored as (in, out) so the kernel does x @ W
    w1 = jax.random.uniform(k1, (in_channels, mlp_hidden_size),
                            jnp.float32, -lim1, lim1)
    b1 = jax.random.uniform(k2, (1, mlp_hidden_size), jnp.float32, -lim1, lim1)
    gamma = jnp.ones((1, mlp_hidden_size), jnp.float32)   # BN affine init
    beta = jnp.zeros((1, mlp_hidden_size), jnp.float32)
    w2 = jax.random.uniform(k3, (mlp_hidden_size, low_dim),
                            jnp.float32, -lim2, lim2)
    b2 = jax.random.uniform(k4, (1, low_dim), jnp.float32, -lim2, lim2)
    return w1, b1, gamma, beta, w2, b2


def _reference(x, w1, b1, gamma, beta, w2, b2, eps=1e-5):
    """Pure-JAX f32 reference of the PyTorch forward (training-mode BN)."""
    h = x @ w1 + b1
    mean = jnp.mean(h, axis=0, keepdims=True)
    var = jnp.mean((h - mean) ** 2, axis=0, keepdims=True)
    hn = (h - mean) * jax.lax.rsqrt(var + eps) * gamma + beta
    hr = jnp.maximum(hn, 0.0)
    z = hr @ w2 + b2
    nrm = jnp.maximum(jnp.linalg.norm(z, axis=1, keepdims=True), 1e-12)
    return z / nrm


if __name__ == "__main__":
    # args['learn'] = {'head_num': 1, 'head_size': 2, 'low_dim': 16}
    batch, in_channels, mlp_hidden_size, low_dim = 8, 32, 64, 16

    key = jax.random.PRNGKey(0)
    kx, kp = jax.random.split(key)
    x = jax.random.normal(kx, (batch, in_channels), jnp.float32)
    params = init_params(kp, in_channels, mlp_hidden_size, low_dim)

    out = mlp_head_forward(x, *params)
    out = jax.block_until_ready(out)

    assert out.shape == (batch, low_dim)
    out_f32 = out.astype(jnp.float32)
    # rows are unit-norm after F.normalize (bf16 output rounding allowed)
    norms = jnp.linalg.norm(out_f32, axis=1)
    assert bool(jnp.all(jnp.abs(norms - 1.0) < 1e-2))
    # matches the f32 reference up to bf16 matmul / store precision
    ref = _reference(x, *params)
    assert bool(jnp.max(jnp.abs(out_f32 - ref)) < 5e-2)
    print("KERNEL_OK")
</pallas_src>

<mosaic_0001>
module attributes {stable_mosaic.version = 11 : i64} {
  func.func @mlp_head_fused_kernel(%arg0: i32, %arg1: i32, %arg2: memref<16x32xbf16, #tpu.memory_space<vmem>>, %arg3: memref<32x128xbf16, #tpu.memory_space<vmem>>, %arg4: memref<1x128xf32, #tpu.memory_space<vmem>>, %arg5: memref<1x128xf32, #tpu.memory_space<vmem>>, %arg6: memref<128x16xbf16, #tpu.memory_space<vmem>>, %arg7: memref<1x16xf32, #tpu.memory_space<vmem>>, %arg8: memref<16x16xbf16, #tpu.memory_space<vmem>>, %arg9: memref<1x128xf32, #tpu.memory_space<vmem>>, %arg10: memref<1x128xf32, #tpu.memory_space<vmem>>, %arg11: memref<1x128xf32, #tpu.memory_space<vmem>>, %arg12: memref<1x128xf32, #tpu.memory_space<vmem>>) attributes {dimension_semantics = [#tpu.dimension_semantics<arbitrary>, #tpu.dimension_semantics<arbitrary>], iteration_bounds = array<i64: 2, 1>, scalar_prefetch = 0 : i64, scratch_operands = 4 : i64, tpu.core_type = #tpu.core_type<tc>, window_params = [{transform_indices = @transform_0, window_bounds = array<i64: 16, 32>}, {pipeline_mode = #tpu.pipeline_mode<synchronous>, transform_indices = @transform_1, window_bounds = array<i64: 32, 128>}, {pipeline_mode = #tpu.pipeline_mode<synchronous>, transform_indices = @transform_2, window_bounds = array<i64: 1, 128>}, {pipeline_mode = #tpu.pipeline_mode<synchronous>, transform_indices = @transform_3, window_bounds = array<i64: 1, 128>}, {pipeline_mode = #tpu.pipeline_mode<synchronous>, transform_indices = @transform_4, window_bounds = array<i64: 128, 16>}, {pipeline_mode = #tpu.pipeline_mode<synchronous>, transform_indices = @transform_5, window_bounds = array<i64: 1, 16>}, {transform_indices = @transform_6, window_bounds = array<i64: 16, 16>}]} {
    %c0_i32 = arith.constant 0 : i32
    %0 = arith.cmpi eq, %arg0, %c0_i32 : i32
    %c0_i32_0 = arith.constant 0 : i32
    %1 = arith.cmpi eq, %arg1, %c0_i32_0 : i32
    %2 = arith.andi %0, %1 : i1
    %3 = arith.extui %2 : i1 to i32
    %c0_i32_1 = arith.constant 0 : i32
    %4 = arith.cmpi ne, %3, %c0_i32_1 : i32
    scf.if %4 {
      %cst = arith.constant 0.000000e+00 : f32
      %16 = vector.broadcast %cst : f32 to vector<1x128xf32>
      %c0 = arith.constant 0 : index
      %c0_8 = arith.constant 0 : index
      %17 = vector.load %arg9[%c0, %c0_8] : memref<1x128xf32, #tpu.memory_space<vmem>>, vector<1x128xf32>
      tpu.vector_store %arg9[%c0, %c0_8], %16 {strides = array<i32>} : memref<1x128xf32, #tpu.memory_space<vmem>>, vector<1x128xf32>,
      %cst_9 = arith.constant 0.000000e+00 : f32
      %18 = vector.broadcast %cst_9 : f32 to vector<1x128xf32>
      %c0_10 = arith.constant 0 : index
      %c0_11 = arith.constant 0 : index
      %19 = vector.load %arg10[%c0_10, %c0_11] : memref<1x128xf32, #tpu.memory_space<vmem>>, vector<1x128xf32>
      tpu.vector_store %arg10[%c0_10, %c0_11], %18 {strides = array<i32>} : memref<1x128xf32, #tpu.memory_space<vmem>>, vector<1x128xf32>,
    } else {
    }
    %c0_i32_2 = arith.constant 0 : i32
    %5 = arith.cmpi eq, %arg0, %c0_i32_2 : i32
    %6 = arith.extui %5 : i1 to i32
    %c0_i32_3 = arith.constant 0 : i32
    %7 = arith.cmpi ne, %6, %c0_i32_3 : i32
    scf.if %7 {
      %c0 = arith.constant 0 : index
      %c0_8 = arith.constant 0 : index
      %16 = vector.load %arg2[%c0, %c0_8] : memref<16x32xbf16, #tpu.memory_space<vmem>>, vector<16x32xbf16>
      %c0_9 = arith.constant 0 : index
      %c0_10 = arith.constant 0 : index
      %17 = vector.load %arg3[%c0_9, %c0_10] : memref<32x128xbf16, #tpu.memory_space<vmem>>, vector<32x128xbf16>
      %cst = arith.constant dense<0.000000e+00> : vector<16x128xf32>
      %18 = tpu.matmul %16, %17, %cst {dimension_numbers = #tpu.dot_dimension_numbers<[1], [0], [0], [1], [0, 0, 1, 1], [], []>} : vector<16x32xbf16>, vector<32x128xbf16>, vector<16x128xf32> -> vector<16x128xf32>
      %c0_11 = arith.constant 0 : index
      %c0_12 = arith.constant 0 : index
      %19 = vector.load %arg9[%c0_11, %c0_12] : memref<1x128xf32, #tpu.memory_space<vmem>>, vector<1x128xf32>
      %cst_13 = arith.constant dense<0.000000e+00> : vector<128xf32>
      %20 = vector.multi_reduction <add>, %18, %cst_13 [0] : vector<16x128xf32> to vector<128xf32>
      %21 = vector.shape_cast %20 : vector<128xf32> to vector<1x128xf32>
      %22 = arith.addf %19, %21 : vector<1x128xf32>
      %c0_14 = arith.constant 0 : index
      %c0_15 = arith.constant 0 : index
      %23 = vector.load %arg9[%c0_14, %c0_15] : memref<1x128xf32, #tpu.memory_space<vmem>>, vector<1x128xf32>
      tpu.vector_store %arg9[%c0_14, %c0_15], %22 {strides = array<i32>} : memref<1x128xf32, #tpu.memory_space<vmem>>, vector<1x128xf32>,
      %c0_16 = arith.constant 0 : index
      %c0_17 = arith.constant 0 : index
      %24 = vector.load %arg10[%c0_16, %c0_17] : memref<1x128xf32, #tpu.memory_space<vmem>>, vector<1x128xf32>
      %25 = arith.mulf %18, %18 : vector<16x128xf32>
      %cst_18 = arith.constant dense<0.000000e+00> : vector<128xf32>
      %26 = vector.multi_reduction <add>, %25, %cst_18 [0] : vector<16x128xf32> to vector<128xf32>
      %27 = vector.shape_cast %26 : vector<128xf32> to vector<1x128xf32>
      %28 = arith.addf %24, %27 : vector<1x128xf32>
      %c0_19 = arith.constant 0 : index
      %c0_20 = arith.constant 0 : index
      %29 = vector.load %arg10[%c0_19, %c0_20] : memref<1x128xf32, #tpu.memory_space<vmem>>, vector<1x128xf32>
      tpu.vector_store %arg10[%c0_19, %c0_20], %28 {strides = array<i32>} : memref<1x128xf32, #tpu.memory_space<vmem>>, vector<1x128xf32>,
    } else {
    }
    %c1_i32 = arith.constant 1 : i32
    %8 = arith.cmpi eq, %arg0, %c1_i32 : i32
    %c0_i32_4 = arith.constant 0 : i32
    %9 = arith.cmpi eq, %arg1, %c0_i32_4 : i32
    %10 = arith.andi %8, %9 : i1
    %11 = arith.extui %10 : i1 to i32
    %c0_i32_5 = arith.constant 0 : i32
    %12 = arith.cmpi ne, %11, %c0_i32_5 : i32
    scf.if %12 {
      %c0 = arith.constant 0 : index
      %c0_8 = arith.constant 0 : index
      %16 = vector.load %arg9[%c0, %c0_8] : memref<1x128xf32, #tpu.memory_space<vmem>>, vector<1x128xf32>
      %cst = arith.constant 1.250000e-01 : f32
      %17 = vector.broadcast %cst : f32 to vector<1x128xf32>
      %18 = arith.mulf %16, %17 : vector<1x128xf32>
      %c0_9 = arith.constant 0 : index
      %c0_10 = arith.constant 0 : index
      %19 = vector.load %arg10[%c0_9, %c0_10] : memref<1x128xf32, #tpu.memory_space<vmem>>, vector<1x128xf32>
      %cst_11 = arith.constant 1.250000e-01 : f32
      %20 = vector.broadcast %cst_11 : f32 to vector<1x128xf32>
      %21 = arith.mulf %19, %20 : vector<1x128xf32>
      %22 = arith.mulf %18, %18 : vector<1x128xf32>
      %23 = arith.subf %21, %22 : vector<1x128xf32>
      %cst_12 = arith.constant 0.000000e+00 : f32
      %24 = vector.broadcast %cst_12 : f32 to vector<1x128xf32>
      %25 = arith.maximumf %23, %24 : vector<1x128xf32>
      %c0_13 = arith.constant 0 : index
      %c0_14 = arith.constant 0 : index
      %26 = vector.load %arg4[%c0_13, %c0_14] : memref<1x128xf32, #tpu.memory_space<vmem>>, vector<1x128xf32>
      %cst_15 = arith.constant 9.99999974E-6 : f32
      %27 = vector.broadcast %cst_15 : f32 to vector<1x128xf32>
      %28 = arith.addf %25, %27 : vector<1x128xf32>
      %29 = math.rsqrt %28 : vector<1x128xf32>
      %30 = arith.mulf %26, %29 : vector<1x128xf32>
      %c0_16 = arith.constant 0 : index
      %c0_17 = arith.constant 0 : index
      %31 = vector.load %arg11[%c0_16, %c0_17] : memref<1x128xf32, #tpu.memory_space<vmem>>, vector<1x128xf32>
      tpu.vector_store %arg11[%c0_16, %c0_17], %30 {strides = array<i32>} : memref<1x128xf32, #tpu.memory_space<vmem>>, vector<1x128xf32>,
      %c0_18 = arith.constant 0 : index
      %c0_19 = arith.constant 0 : index
      %32 = vector.load %arg5[%c0_18, %c0_19] : memref<1x128xf32, #tpu.memory_space<vmem>>, vector<1x128xf32>
      %33 = arith.mulf %18, %30 : vector<1x128xf32>
      %34 = arith.subf %32, %33 : vector<1x128xf32>
      %c0_20 = arith.constant 0 : index
      %c0_21 = arith.constant 0 : index
      %35 = vector.load %arg12[%c0_20, %c0_21] : memref<1x128xf32, #tpu.memory_space<vmem>>, vector<1x128xf32>
      tpu.vector_store %arg12[%c0_20, %c0_21], %34 {strides = array<i32>} : memref<1x128xf32, #tpu.memory_space<vmem>>, vector<1x128xf32>,
    } else {
    }
    %c1_i32_6 = arith.constant 1 : i32
    %13 = arith.cmpi eq, %arg0, %c1_i32_6 : i32
    %14 = arith.extui %13 : i1 to i32
    %c0_i32_7 = arith.constant 0 : i32
    %15 = arith.cmpi ne, %14, %c0_i32_7 : i32
    scf.if %15 {
      %c0 = arith.constant 0 : index
      %c0_8 = arith.constant 0 : index
      %16 = vector.load %arg2[%c0, %c0_8] : memref<16x32xbf16, #tpu.memory_space<vmem>>, vector<16x32xbf16>
      %c0_9 = arith.constant 0 : index
      %c0_10 = arith.constant 0 : index
      %17 = vector.load %arg3[%c0_9, %c0_10] : memref<32x128xbf16, #tpu.memory_space<vmem>>, vector<32x128xbf16>
      %cst = arith.constant dense<0.000000e+00> : vector<16x128xf32>
      %18 = tpu.matmul %16, %17, %cst {dimension_numbers = #tpu.dot_dimension_numbers<[1], [0], [0], [1], [0, 0, 1, 1], [], []>} : vector<16x32xbf16>, vector<32x128xbf16>, vector<16x128xf32> -> vector<16x128xf32>
      %c0_11 = arith.constant 0 : index
      %c0_12 = arith.constant 0 : index
      %19 = vector.load %arg11[%c0_11, %c0_12] : memref<1x128xf32, #tpu.memory_space<vmem>>, vector<1x128xf32>
      %20 = vector.broadcast %19 : vector<1x128xf32> to vector<16x128xf32>
      %21 = arith.mulf %18, %20 : vector<16x128xf32>
      %c0_13 = arith.constant 0 : index
      %c0_14 = arith.constant 0 : index
      %22 = vector.load %arg12[%c0_13, %c0_14] : memref<1x128xf32, #tpu.memory_space<vmem>>, vector<1x128xf32>
      %23 = vector.broadcast %22 : vector<1x128xf32> to vector<16x128xf32>
      %24 = arith.addf %21, %23 : vector<16x128xf32>
      %cst_15 = arith.constant 0.000000e+00 : f32
      %25 = vector.broadcast %cst_15 : f32 to vector<16x128xf32>
      %26 = arith.maximumf %24, %25 : vector<16x128xf32>
      %27 = arith.truncf %26 : vector<16x128xf32> to vector<16x128xbf16>
      %c0_16 = arith.constant 0 : index
      %c0_17 = arith.constant 0 : index
      %28 = vector.load %arg6[%c0_16, %c0_17] : memref<128x16xbf16, #tpu.memory_space<vmem>>, vector<128x16xbf16>
      %cst_18 = arith.constant dense<0.000000e+00> : vector<16x16xf32>
      %29 = tpu.matmul %27, %28, %cst_18 {dimension_numbers = #tpu.dot_dimension_numbers<[1], [0], [0], [1], [0, 0, 1, 1], [], []>} : vector<16x128xbf16>, vector<128x16xbf16>, vector<16x16xf32> -> vector<16x16xf32>
      %c0_19 = arith.constant 0 : index
      %c0_20 = arith.constant 0 : index
      %30 = vector.load %arg7[%c0_19, %c0_20] : memref<1x16xf32, #tpu.memory_space<vmem>>, vector<1x16xf32>
      %31 = vector.broadcast %30 : vector<1x16xf32> to vector<16x16xf32>
      %32 = arith.addf %29, %31 : vector<16x16xf32>
      %33 = arith.mulf %32, %32 : vector<16x16xf32>
      %cst_21 = arith.constant dense<0.000000e+00> : vector<16xf32>
      %34 = vector.multi_reduction <add>, %33, %cst_21 [1] : vector<16x16xf32> to vector<16xf32>
      %35 = vector.shape_cast %34 : vector<16xf32> to vector<16x1xf32>
      %cst_22 = arith.constant 1.000000e-24 : f32
      %36 = vector.broadcast %cst_22 : f32 to vector<16x1xf32>
      %37 = arith.maximumf %35, %36 : vector<16x1xf32>
      %38 = math.rsqrt %37 : vector<16x1xf32>
      %39 = vector.broadcast %38 : vector<16x1xf32> to vector<16x16xf32>
      %40 = arith.mulf %32, %39 : vector<16x16xf32>
      %41 = arith.truncf %40 : vector<16x16xf32> to vector<16x16xbf16>
      %c0_23 = arith.constant 0 : index
      %c0_24 = arith.constant 0 : index
      %42 = vector.load %arg8[%c0_23, %c0_24] : memref<16x16xbf16, #tpu.memory_space<vmem>>, vector<16x16xbf16>
      tpu.vector_store %arg8[%c0_23, %c0_24], %41 {strides = array<i32>} : memref<16x16xbf16, #tpu.memory_space<vmem>>, vector<16x16xbf16>,
    } else {
    }
    return
  }
  func.func @transform_0(%arg0: i32, %arg1: i32) -> (i32, i32) {
    %c0_i32 = arith.constant 0 : i32
    %c0_i32_0 = arith.constant 0 : i32
    return %arg1, %c0_i32 : i32, i32
  }
  func.func @transform_1(%arg0: i32, %arg1: i32) -> (i32, i32) {
    %c0_i32 = arith.constant 0 : i32
    %c0_i32_0 = arith.constant 0 : i32
    %c0_i32_1 = arith.constant 0 : i32
    return %c0_i32, %c0_i32_0 : i32, i32
  }
  func.func @transform_2(%arg0: i32, %arg1: i32) -> (i32, i32) {
    %c0_i32 = arith.constant 0 : i32
    %c0_i32_0 = arith.constant 0 : i32
    %c0_i32_1 = arith.constant 0 : i32
    return %c0_i32, %c0_i32_0 : i32, i32
  }
  func.func @transform_3(%arg0: i32, %arg1: i32) -> (i32, i32) {
    %c0_i32 = arith.constant 0 : i32
    %c0_i32_0 = arith.constant 0 : i32
    %c0_i32_1 = arith.constant 0 : i32
    return %c0_i32, %c0_i32_0 : i32, i32
  }
  func.func @transform_4(%arg0: i32, %arg1: i32) -> (i32, i32) {
    %c0_i32 = arith.constant 0 : i32
    %c0_i32_0 = arith.constant 0 : i32
    %c0_i32_1 = arith.constant 0 : i32
    return %c0_i32, %c0_i32_0 : i32, i32
  }
  func.func @transform_5(%arg0: i32, %arg1: i32) -> (i32, i32) {
    %c0_i32 = arith.constant 0 : i32
    %c0_i32_0 = arith.constant 0 : i32
    %c0_i32_1 = arith.constant 0 : i32
    return %c0_i32, %c0_i32_0 : i32, i32
  }
  func.func @transform_6(%arg0: i32, %arg1: i32) -> (i32, i32) {
    %0 = arith.muli %arg1, %arg0 : i32
    %c0_i32 = arith.constant 0 : i32
    %c0_i32_0 = arith.constant 0 : i32
    return %0, %c0_i32 : i32, i32
  }
}

</mosaic_0001>

<llo_original>
// kernel: tpu_custom_call.1
$region0: #{tpu_custom_call.1}
  #allocation0 [shape = 'u32[]', space=smem, size = 0x4, offset = 0x4, fixed_abs, tag = 'smem constant byte address 0x4 - core index']
  #allocation1 [shape = 'u32[144,128]{1,0:T(1,128)}', space=vmem, size = 0x12000, scoped, tag = 'internal scratch']
  #allocation2 [shape = 'f32[1,128]{1,0:T(1,128)}', space=vmem, size = 0x200, scoped, tag = 'scratch operand']
  #allocation3 [shape = 'f32[1,128]{1,0:T(1,128)}', space=vmem, size = 0x200, scoped, tag = 'scratch operand']
  #allocation4 [shape = 'f32[1,128]{1,0:T(1,128)}', space=vmem, size = 0x200, scoped, tag = 'scratch operand']
  #allocation5 [shape = 'f32[1,128]{1,0:T(1,128)}', space=vmem, size = 0x200, scoped, tag = 'scratch operand']
  %s0 = inlined_call_operand.vmem [shape: bf16[16,32], index: 0, kind: input, shape index: {}]
  %s1 = inlined_call_operand.vmem [shape: bf16[32,128], index: 1, kind: input, shape index: {}]
  %s2 = inlined_call_operand.vmem [shape: f32[1,128], index: 2, kind: input, shape index: {}]
  %s3 = inlined_call_operand.vmem [shape: f32[1,128], index: 3, kind: input, shape index: {}]
  %s4 = inlined_call_operand.vmem [shape: bf16[128,16], index: 4, kind: input, shape index: {}]
  %s5 = inlined_call_operand.vmem [shape: f32[1,16], index: 5, kind: input, shape index: {}]
  %s6 = inlined_call_operand.hbm [shape: bf16[16,16], index: 6, kind: output, shape index: {}]
  %s7 = sld [smem:[#allocation0]]
  $region73: #{tpu_custom_call.1} parent=0
    _
  %s9 = ssub.s32 1, %s7
  %s10 = scalar_select 0, %s9, %s7
  $region1: #{tpu_custom_call.1} parent=0
    #allocation6 [shape = 'u8[8192]{0}', space=vmem, size = 0x2000, scoped, tag = 'output window, operand 0']
    #allocation7 [shape = 's32[2]{0}', space=sflag, size = 0x8, scoped, tag = 'scoped memory for tpu_custom_call.1']
    %11 = vsyncpa [#allocation7], 0
    %s12 = scalar_lea.sflag [#allocation7], 1
    %13 = vsyncpa %s12, 0
    loop: start=0, step=1, limit=4
    $region2: #{tpu_custom_call.1} parent=1 // loop_pre_header
      _
    $region3: #{tpu_custom_call.1} parent=1 // loop_header
      %s15 = sphi 0, %s19
      %p16 = scmp.ge.s32.totalorder %s15, 4
      %s22 = sphi 0, %s34
      %s23 = sphi 0, %s30
      %s24 = sphi 0, %s22
      %s25 = sphi 0, %s23
      %s26 = sphi 0, %s24
      %s27 = sphi 0, %s25
      %s37 = sphi 0, %s39
      %s40 = sphi 0, %s37
      %s41 = sphi 0, %s40
      %s57 = sphi 0, %s41
      %s61 = sphi 0, %s61
      %s63 = sphi 0, %s61
      %s64 = sphi 0, %s63
      %s78 = sphi 0, %s64
      %s82 = sphi 0, %s82
      %s84 = sphi 0, %s82
      %s85 = sphi 0, %s84
      %s99 = sphi 0, %s85
      %s103 = sphi 0, %s103
      %s105 = sphi 0, %s103
      %s106 = sphi 0, %s105
      %s120 = sphi 0, %s106
      %s124 = sphi 0, %s124
      %s126 = sphi 0, %s124
      %s127 = sphi 0, %s126
      %s141 = sphi 0, %s127
      %s145 = sphi 0, %s145
      %s147 = sphi 0, %s145
      %s148 = sphi 0, %s147
      %s162 = sphi 0, %s148
      %s170 = sphi 0, %s172
      %s173 = sphi 0, %s170
      %s174 = sphi 0, %s173
      %s190 = sphi 0, %s174
    $region4: #{tpu_custom_call.1} parent=1 // loop_header_branch
      %18 = sbr.rel (%p16) target = $region8
    $region5: #{tpu_custom_call.1} parent=1 // loop_body
      %s20 = ssub.s32 %s15, 1
      %s21 = ssub.s32 %s15, 2
      %s28 = sadd.s32 1, %s23
      %p29 = scmp.ge.s32.totalorder %s28, 1
      %s30 = scalar_select %p29, 0, %s28
      %s31 = sadd.s32 1, %s22
      %s32 = scalar_select %p29, %s31, %s22
      %p33 = scmp.ge.s32.totalorder %s32, 2
      %s34 = scalar_select %p33, 0, %s32
      %s35 = ssub.s32 %s23, %s30
      %p36 = scmp.eq.s32.totalorder %s35, 0
      %s38 = sadd.s32 %s37, 1
      %s39 = scalar_select %p36, %s37, %s38
      %p42 = pneg %p36
      %p43 = scmp.eq.s32.totalorder %s15, 1
      %p44 = por %p42, %p43
      %p45 = scmp.ne.s32.totalorder %s37, %s40
      %p46 = scmp.eq.s32.totalorder %s15, 0
      %p47 = por %p45, %p46
      %p48 = scmp.ne.s32.totalorder %s37, %s40
      %p49 = scmp.eq.s32.totalorder %s20, 1
      %p50 = por %p48, %p49
      %p51 = scmp.ne.s32.totalorder %s40, %s41
      %p52 = scmp.eq.s32.totalorder %s20, 0
      %p53 = por %p51, %p52
      %p54 = scmp.ne.s32.totalorder %s40, %s41
      %p55 = scmp.eq.s32.totalorder %s21, 1
      %p56 = por %p54, %p55
      %p58 = scmp.ne.s32.totalorder %s41, %s57
      %p59 = scmp.eq.s32.totalorder %s21, 0
      %p60 = por %p58, %p59
      %s62 = sadd.s32 %s61, 1
      %p65 = scmp.eq.s32.totalorder %s15, 1
      %p66 = scmp.ne.s32.totalorder %s61, %s63
      %p67 = scmp.eq.s32.totalorder %s15, 0
      %p68 = por %p66, %p67
      %p69 = scmp.ne.s32.totalorder %s61, %s63
      %p70 = scmp.eq.s32.totalorder %s20, 1
      %p71 = por %p69, %p70
      %p72 = scmp.ne.s32.totalorder %s63, %s64
      %p73 = scmp.eq.s32.totalorder %s20, 0
      %p74 = por %p72, %p73
      %p75 = scmp.ne.s32.totalorder %s63, %s64
      %p76 = scmp.eq.s32.totalorder %s21, 1
      %p77 = por %p75, %p76
      %p79 = scmp.ne.s32.totalorder %s64, %s78
      %p80 = scmp.eq.s32.totalorder %s21, 0
      %p81 = por %p79, %p80
      %s83 = sadd.s32 %s82, 1
      %p86 = scmp.eq.s32.totalorder %s15, 1
      %p87 = scmp.ne.s32.totalorder %s82, %s84
      %p88 = scmp.eq.s32.totalorder %s15, 0
      %p89 = por %p87, %p88
      %p90 = scmp.ne.s32.totalorder %s82, %s84
      %p91 = scmp.eq.s32.totalorder %s20, 1
      %p92 = por %p90, %p91
      %p93 = scmp.ne.s32.totalorder %s84, %s85
      %p94 = scmp.eq.s32.totalorder %s20, 0
      %p95 = por %p93, %p94
      %p96 = scmp.ne.s32.totalorder %s84, %s85
      %p97 = scmp.eq.s32.totalorder %s21, 1
      %p98 = por %p96, %p97
      %p100 = scmp.ne.s32.totalorder %s85, %s99
      %p101 = scmp.eq.s32.totalorder %s21, 0
      %p102 = por %p100, %p101
      %s104 = sadd.s32 %s103, 1
      %p107 = scmp.eq.s32.totalorder %s15, 1
      %p108 = scmp.ne.s32.totalorder %s103, %s105
      %p109 = scmp.eq.s32.totalorder %s15, 0
      %p110 = por %p108, %p109
      %p111 = scmp.ne.s32.totalorder %s103, %s105
      %p112 = scmp.eq.s32.totalorder %s20, 1
      %p113 = por %p111, %p112
      %p114 = scmp.ne.s32.totalorder %s105, %s106
      %p115 = scmp.eq.s32.totalorder %s20, 0
      %p116 = por %p114, %p115
      %p117 = scmp.ne.s32.totalorder %s105, %s106
      %p118 = scmp.eq.s32.totalorder %s21, 1
      %p119 = por %p117, %p118
      %p121 = scmp.ne.s32.totalorder %s106, %s120
      %p122 = scmp.eq.s32.totalorder %s21, 0
      %p123 = por %p121, %p122
      %s125 = sadd.s32 %s124, 1
      %p128 = scmp.eq.s32.totalorder %s15, 1
      %p129 = scmp.ne.s32.totalorder %s124, %s126
      %p130 = scmp.eq.s32.totalorder %s15, 0
      %p131 = por %p129, %p130
      %p132 = scmp.ne.s32.totalorder %s124, %s126
      %p133 = scmp.eq.s32.totalorder %s20, 1
      %p134 = por %p132, %p133
      %p135 = scmp.ne.s32.totalorder %s126, %s127
      %p136 = scmp.eq.s32.totalorder %s20, 0
      %p137 = por %p135, %p136
      %p138 = scmp.ne.s32.totalorder %s126, %s127
      %p139 = scmp.eq.s32.totalorder %s21, 1
      %p140 = por %p138, %p139
      %p142 = scmp.ne.s32.totalorder %s127, %s141
      %p143 = scmp.eq.s32.totalorder %s21, 0
      %p144 = por %p142, %p143
      %s146 = sadd.s32 %s145, 1
      %p149 = scmp.eq.s32.totalorder %s15, 1
      %p150 = scmp.ne.s32.totalorder %s145, %s147
      %p151 = scmp.eq.s32.totalorder %s15, 0
      %p152 = por %p150, %p151
      %p153 = scmp.ne.s32.totalorder %s145, %s147
      %p154 = scmp.eq.s32.totalorder %s20, 1
      %p155 = por %p153, %p154
      %p156 = scmp.ne.s32.totalorder %s147, %s148
      %p157 = scmp.eq.s32.totalorder %s20, 0
      %p158 = por %p156, %p157
      %p159 = scmp.ne.s32.totalorder %s147, %s148
      %p160 = scmp.eq.s32.totalorder %s21, 1
      %p161 = por %p159, %p160
      %p163 = scmp.ne.s32.totalorder %s148, %s162
      %p164 = scmp.eq.s32.totalorder %s21, 0
      %p165 = por %p163, %p164
      %s166 = smul.u32 %s23, %s22
      %s167 = smul.u32 %s30, %s34
      %s168 = ssub.s32 %s166, %s167
      %p169 = scmp.eq.s32.totalorder %s168, 0
      %s171 = sadd.s32 %s170, 1
      %s172 = scalar_select %p169, %s170, %s171
      %p175 = pneg %p169
      %p176 = scmp.eq.s32.totalorder %s15, 1
      %p177 = por %p175, %p176
      %p178 = scmp.ne.s32.totalorder %s170, %s173
      %p179 = scmp.eq.s32.totalorder %s15, 0
      %p180 = por %p178, %p179
      %p181 = scmp.ne.s32.totalorder %s170, %s173
      %p182 = scmp.eq.s32.totalorder %s20, 1
      %p183 = por %p181, %p182
      %p184 = scmp.ne.s32.totalorder %s173, %s174
      %p185 = scmp.eq.s32.totalorder %s20, 0
      %p186 = por %p184, %p185
      %p187 = scmp.ne.s32.totalorder %s173, %s174
      %p188 = scmp.eq.s32.totalorder %s21, 1
      %p189 = por %p187, %p188
      %p191 = scmp.ne.s32.totalorder %s174, %s190
      %p192 = scmp.eq.s32.totalorder %s21, 0
      %p193 = por %p191, %p192
      %p194 = scmp.le.s32.totalorder 1, %s15
      %p195 = scmp.lt.s32.totalorder %s15, 3
      %p196 = pnand %p194, %p195
      %p197 = pneg %p196
      // Predicated region
      $region9: #{tpu_custom_call.1} parent=5 // pred_check
        _
      $region10: #{tpu_custom_call.1} parent=5 // pred_check_branch
        %199 = sbr.rel (%p196) target = $region12
      $region11: #{tpu_custom_call.1} parent=5 // pred_region
        %s200 = ssub.s32 %s15, 1
        // Predicated region
        $region13: #{tpu_custom_call.1} parent=11 // pred_check
          %p201 = pneg %p53
        $region14: #{tpu_custom_call.1} parent=11 // pred_check_branch
          %203 = sbr.rel (%p201) target = $region16
        $region15: #{tpu_custom_call.1} parent=11 // pred_region
          %s204 = smul.u32 2, %s25
          %p205 = scmp.lt.s32.totalorder %s204, 1
          %s206 = scalar_select %p205, %s204, 1
          %s207 = smul.addr %s206, 4
          %s208 = scalar_lea.vmem %s0, %s207
          %s209 = smul.u32 2, %s25
        $region16: #{tpu_custom_call.1} parent=11 // pred_fallthru
          _
        // Predicated region
        $region17: #{tpu_custom_call.1} parent=11 // pred_check
          %p210 = pneg %p74
        $region18: #{tpu_custom_call.1} parent=11 // pred_check_branch
          %212 = sbr.rel (%p210) target = $region20
        $region19: #{tpu_custom_call.1} parent=11 // pred_region
          _
        $region20: #{tpu_custom_call.1} parent=11 // pred_fallthru
          _
        // Predicated region
        $region21: #{tpu_custom_call.1} parent=11 // pred_check
          %p213 = pneg %p95
        $region22: #{tpu_custom_call.1} parent=11 // pred_check_branch
          %215 = sbr.rel (%p213) target = $region24
        $region23: #{tpu_custom_call.1} parent=11 // pred_region
          _
        $region24: #{tpu_custom_call.1} parent=11 // pred_fallthru
          _
        // Predicated region
        $region25: #{tpu_custom_call.1} parent=11 // pred_check
          %p216 = pneg %p116
        $region26: #{tpu_custom_call.1} parent=11 // pred_check_branch
          %218 = sbr.rel (%p216) target = $region28
        $region27: #{tpu_custom_call.1} parent=11 // pred_region
          _
        $region28: #{tpu_custom_call.1} parent=11 // pred_fallthru
          _
        // Predicated region
        $region29: #{tpu_custom_call.1} parent=11 // pred_check
          %p219 = pneg %p137
        $region30: #{tpu_custom_call.1} parent=11 // pred_check_branch
          %221 = sbr.rel (%p219) target = $region32
        $region31: #{tpu_custom_call.1} parent=11 // pred_region
          _
        $region32: #{tpu_custom_call.1} parent=11 // pred_fallthru
          _
        // Predicated region
        $region33: #{tpu_custom_call.1} parent=11 // pred_check
          %p222 = pneg %p158
        $region34: #{tpu_custom_call.1} parent=11 // pred_check_branch
          %224 = sbr.rel (%p222) target = $region36
        $region35: #{tpu_custom_call.1} parent=11 // pred_region
          _
        $region36: #{tpu_custom_call.1} parent=11 // pred_fallthru
          _
      $region12: #{tpu_custom_call.1} parent=5 // pred_fallthru
        _
      %p225 = scmp.lt.s32.totalorder %s15, 2
      // Predicated region
      $region37: #{tpu_custom_call.1} parent=5 // pred_check
        %p226 = pneg %p225
      $region38: #{tpu_custom_call.1} parent=5 // pred_check_branch
        %228 = sbr.rel (%p226) target = $region40
      $region39: #{tpu_custom_call.1} parent=5 // pred_region
        _
      $region40: #{tpu_custom_call.1} parent=5 // pred_fallthru
        _
      %p229 = scmp.le.s32.totalorder 1, %s15
      %p230 = scmp.lt.s32.totalorder %s15, 3
      %p231 = pnand %p229, %p230
      %p232 = pneg %p231
      // Predicated region
      $region41: #{tpu_custom_call.1} parent=5 // pred_check
        _
      $region42: #{tpu_custom_call.1} parent=5 // pred_check_branch
        %234 = sbr.rel (%p231) target = $region44
      $region43: #{tpu_custom_call.1} parent=5 // pred_region
        %s235 = ssub.s32 %s15, 1
        %s236 = smul.u32 2, %s25
        %p237 = scmp.lt.s32.totalorder %s236, 1
        %s238 = scalar_select %p237, %s236, 1
        %s239 = smul.addr %s238, 4
        %s240 = scalar_lea.vmem %s0, %s239
        %p241 = pneg %p53
        %p242 = pneg %p50
        %p243 = pneg %p74
        %p244 = pneg %p71
        %p245 = pneg %p95
        %p246 = pneg %p92
        %p247 = pneg %p116
        %p248 = pneg %p113
        %p249 = pneg %p137
        %p250 = pneg %p134
        %p251 = pneg %p158
        %p252 = pneg %p155
        %p253 = pneg %p186
        %p254 = pneg %p183
        %s255 = sand.u32 %s173, 1
        %s256 = scalar_lea.sflag [#allocation7], %s255
        %s257 = sand.u32 %s173, 1
        %s258 = smul.addr %s257, 8
        %s259 = scalar_lea.vmem [#allocation6], %s258
        %s260 = smul.u32 2, %s25
        %p261 = scmp.lt.s32.totalorder %s260, 1
        %s262 = scalar_select %p261, %s260, 1
        %s263 = smul.addr %s262, 4
        %s264 = scalar_lea.vmem %s0, %s263
        %s265 = smul.u32 2, %s25
        %s266 = smul.u32 %s25, %s24
        %s267 = smul.u32 2, %s266
        %p269 = scmp.eq.s32.totalorder %s24, 0
        %p270 = scmp.eq.s32.totalorder %s25, 0
        %p271 = pnand %p269, %p270
        %p272 = pneg %p271
        // Predicated region
        $region45: #{tpu_custom_call.1} parent=43 // pred_check
          _
        $region46: #{tpu_custom_call.1} parent=43 // pred_check_branch
          %274 = sbr.rel (%p271) target = $region48
        $region47: #{tpu_custom_call.1} parent=43 // pred_region
          %275 = vst [vmem:[#allocation2] sm:$0x1] 0.0
          %276 = vst [vmem:[#allocation3] sm:$0x1] 0.0
        $region48: #{tpu_custom_call.1} parent=43 // pred_fallthru
          _
        // Predicated region
        $region49: #{tpu_custom_call.1} parent=43 // pred_check
          %p277 = pneg %p269
        $region50: #{tpu_custom_call.1} parent=43 // pred_check_branch
          %279 = sbr.rel (%p277) target = $region52
        $region51: #{tpu_custom_call.1} parent=43 // pred_region
          %v280 = vld [vmem:[%s264] sm:$0xf]
          %v281 = vld [vmem:[%s264 + $0x4] sm:$0xf]
          %v282 = vld [vmem:[%s1] sm:$0xf]
          %v283 = vld [vmem:[%s1 + $0x4] sm:$0xf]
          %v284 = vld [vmem:[%s1 + $0x8] sm:$0xf]
          %v285 = vld [vmem:[%s1 + $0xc] sm:$0xf]
          %v288 = vunpack.c.l.b16 %v280
          %v289 = vunpack.c.l.b16 %v281
          %v290 = vpack.c.b16 %v289, %v288
          %v295 = vunpack.c.l.b16 %v282
          %v296 = vunpack.c.l.b16 %v283
          %v297 = vunpack.c.l.b16 %v284
          %v298 = vunpack.c.l.b16 %v285
          %v299 = vpack.c.b16 %v296, %v295
          %v300 = vpack.c.b16 %v298, %v297
          %vm303 = vcmask 261120
          %v305 = vsel %vm303, %v290, 0
          %307 = vmatprep.subr.bf16.mxu0 0
          %308 = vmatpush1.bf16.msra.mxu0 0
          %309 = vmatprep.subr.bf16.mxu0 0
          %310 = vmatpush1.bf16.msra.mxu0 0
          %311 = vmatprep.subr.bf16.mxu0 0
          %312 = vmatpush1.bf16.msra.mxu0 0
          %313 = vmatprep.subr.bf16.mxu0 0
          %314 = vmatpush1.bf16.msra.mxu0 0
          %315 = vmatprep.subr.bf16.mxu0 0
          %316 = vmatpush1.bf16.msra.mxu0 0
          %317 = vmatprep.subr.bf16.mxu0 0
          %318 = vmatpush1.bf16.msra.mxu0 0
          %319 = vmatprep.subr.bf16.mxu0 0
          %320 = vmatpush1.bf16.msra.mxu0 %v300
          %321 = vmatprep.subr.bf16.mxu0 0
          %322 = vmatpush1.bf16.msra.mxu0 %v299
          %323 = vmatprep.subr.bf16.mxu0 0
          %324 = vmatpush2.bf16.msra.mxu0 0
          %325 = vmatprep.subr.bf16.mxu0 0
          %326 = vmatpush2.bf16.msra.mxu0 0
          %327 = vmatprep.subr.bf16.mxu0 0
          %328 = vmatpush2.bf16.msra.mxu0 0
          %329 = vmatprep.subr.bf16.mxu0 0
          %330 = vmatpush2.bf16.msra.mxu0 0
          %331 = vmatprep.subr.bf16.mxu0 0
          %332 = vmatpush2.bf16.msra.mxu0 0
          %333 = vmatprep.subr.bf16.mxu0 0
          %334 = vmatpush2.bf16.msra.mxu0 0
          %335 = vmatprep.subr.bf16.mxu0 0
          %336 = vmatpush2.bf16.msra.mxu0 0
          %337 = vmatprep.subr.bf16.mxu0 0
          %338 = vmatpush2.bf16.msra.mxu0 0
          %339 = vmatprep.mubr.bf16.mxu0 0
          %340 = vmatmul.mubr.bf16.gmra.mxu0 %v305
          %v341 = vpop.f32.mrf.mxu0
          %v342 = vadd.f32 0.0, %v341
          %v343 = vpop.f32.mrf.mxu0
          %v344 = vpop.f32.mrf.mxu0
          %v345 = vadd.f32 0.0, %v344
          %v346 = vpop.f32.mrf.mxu0
          %347 = vdwg.mxu0
          %v348 = vld [vmem:[#allocation2] sm:$0x1]
          %v349 = vadd.f32 %v342, %v345
          %v350 = vrot.slane %v349, 4
          %v351 = vadd.f32 %v349, %v350
          %v352 = vrot.slane %v351, 2
          %v353 = vadd.f32 %v351, %v352
          %v354 = vrot.slane %v353, 1
          %v355 = vadd.f32 %v353, %v354
          %v356 = vadd.f32 %v348, %v355
          %357 = vst [vmem:[#allocation2] sm:$0x1] %v356
          %v358 = vld [vmem:[#allocation3] sm:$0x1]
          %v359 = vmul.f32 %v342, %v342
          %v360 = vmul.f32 %v345, %v345
          %v361 = vadd.f32 %v359, %v360
          %v362 = vrot.slane %v361, 4
          %v363 = vadd.f32 %v361, %v362
          %v364 = vrot.slane %v363, 2
          %v365 = vadd.f32 %v363, %v364
          %v366 = vrot.slane %v365, 1
          %v367 = vadd.f32 %v365, %v366
          %v368 = vadd.f32 %v358, %v367
          %369 = vst [vmem:[#allocation3] sm:$0x1] %v368
        $region52: #{tpu_custom_call.1} parent=43 // pred_fallthru
          _
        %p370 = scmp.eq.s32.totalorder %s24, 1
        %p371 = pnand %p370, %p270
        %p372 = pneg %p371
        // Predicated region
        $region53: #{tpu_custom_call.1} parent=43 // pred_check
          _
        $region54: #{tpu_custom_call.1} parent=43 // pred_check_branch
          %374 = sbr.rel (%p371) target = $region56
        $region55: #{tpu_custom_call.1} parent=43 // pred_region
          %v375 = vld [vmem:[#allocation2] sm:$0x1]
          %v376 = vmul.f32 %v375, 0.125
          %v377 = vld [vmem:[#allocation3] sm:$0x1]
          %v378 = vmul.f32 %v377, 0.125
          %v379 = vmul.f32 %v376, %v376
          %v380 = vsub.f32 %v378, %v379
          %v381 = vmax.f32 %v380, 0.0
          %v382 = vld [vmem:[%s2] sm:$0x1]
          %v383 = vadd.f32 %v381, 1e-05
          %v384 = vrsqrt.pop %v383
          %v385 = vmul.f32 %v382, %v384
          %386 = vst [vmem:[#allocation4] sm:$0x1] %v385
          %v387 = vld [vmem:[%s3] sm:$0x1]
          %v388 = vmul.f32 %v376, %v385
          %v389 = vsub.f32 %v387, %v388
          %390 = vst [vmem:[#allocation5] sm:$0x1] %v389
        $region56: #{tpu_custom_call.1} parent=43 // pred_fallthru
          _
        // Predicated region
        $region57: #{tpu_custom_call.1} parent=43 // pred_check
          %p391 = pneg %p370
        $region58: #{tpu_custom_call.1} parent=43 // pred_check_branch
          %393 = sbr.rel (%p391) target = $region60
        $region59: #{tpu_custom_call.1} parent=43 // pred_region
          %v394 = vld [vmem:[%s264] sm:$0xf]
          %v395 = vld [vmem:[%s264 + $0x4] sm:$0xf]
          %v396 = vld [vmem:[%s1] sm:$0xf]
          %v397 = vld [vmem:[%s1 + $0x4] sm:$0xf]
          %v398 = vld [vmem:[%s1 + $0x8] sm:$0xf]
          %v399 = vld [vmem:[%s1 + $0xc] sm:$0xf]
          %v402 = vunpack.c.l.b16 %v394
          %v403 = vunpack.c.l.b16 %v395
          %v404 = vpack.c.b16 %v403, %v402
          %v409 = vunpack.c.l.b16 %v396
          %v410 = vunpack.c.l.b16 %v397
          %v411 = vunpack.c.l.b16 %v398
          %v412 = vunpack.c.l.b16 %v399
          %v413 = vpack.c.b16 %v410, %v409
          %v414 = vpack.c.b16 %v412, %v411
          %vm417 = vcmask 261120
          %v419 = vsel %vm417, %v404, 0
          %421 = vmatprep.subr.bf16.mxu0 0
          %422 = vmatpush1.bf16.msra.mxu0 0
          %423 = vmatprep.subr.bf16.mxu0 0
          %424 = vmatpush1.bf16.msra.mxu0 0
          %425 = vmatprep.subr.bf16.mxu0 0
          %426 = vmatpush1.bf16.msra.mxu0 0
          %427 = vmatprep.subr.bf16.mxu0 0
          %428 = vmatpush1.bf16.msra.mxu0 0
          %429 = vmatprep.subr.bf16.mxu0 0
          %430 = vmatpush1.bf16.msra.mxu0 0
          %431 = vmatprep.subr.bf16.mxu0 0
          %432 = vmatpush1.bf16.msra.mxu0 0
          %433 = vmatprep.subr.bf16.mxu0 0
          %434 = vmatpush1.bf16.msra.mxu0 %v414
          %435 = vmatprep.subr.bf16.mxu0 0
          %436 = vmatpush1.bf16.msra.mxu0 %v413
          %437 = vmatprep.subr.bf16.mxu0 0
          %438 = vmatpush2.bf16.msra.mxu0 0
          %439 = vmatprep.subr.bf16.mxu0 0
          %440 = vmatpush2.bf16.msra.mxu0 0
          %441 = vmatprep.subr.bf16.mxu0 0
          %442 = vmatpush2.bf16.msra.mxu0 0
          %443 = vmatprep.subr.bf16.mxu0 0
          %444 = vmatpush2.bf16.msra.mxu0 0
          %445 = vmatprep.subr.bf16.mxu0 0
          %446 = vmatpush2.bf16.msra.mxu0 0
          %447 = vmatprep.subr.bf16.mxu0 0
          %448 = vmatpush2.bf16.msra.mxu0 0
          %449 = vmatprep.subr.bf16.mxu0 0
          %450 = vmatpush2.bf16.msra.mxu0 0
          %451 = vmatprep.subr.bf16.mxu0 0
          %452 = vmatpush2.bf16.msra.mxu0 0
          %453 = vmatprep.mubr.bf16.mxu0 0
          %454 = vmatmul.mubr.bf16.gmra.mxu0 %v419
          %v455 = vpop.f32.mrf.mxu0
          %v456 = vadd.f32 0.0, %v455
          %v457 = vpop.f32.mrf.mxu0
          %v458 = vpop.f32.mrf.mxu0
          %v459 = vadd.f32 0.0, %v458
          %v460 = vpop.f32.mrf.mxu0
          %461 = vdwg.mxu0
          %v462 = vld [vmem:[#allocation4] sm:$0x1]
          %v464 = vlaneseq
          %v465 = vshrl.u32 %v464, 7
          %v466 = vsub.s32 0, %v465
          %v467 = vrot.slane %v462, %v466
          %v469 = vmul.f32 %v456, %v467
          %v470 = vmul.f32 %v459, %v467
          %v471 = vld [vmem:[#allocation5] sm:$0x1]
          %v473 = vlaneseq
          %v474 = vshrl.u32 %v473, 7
          %v475 = vsub.s32 0, %v474
          %v476 = vrot.slane %v471, %v475
          %v478 = vadd.f32 %v469, %v476
          %v479 = vadd.f32 %v470, %v476
          %v480 = vmax.f32 %v478, 0.0
          %v481 = vmax.f32 %v479, 0.0
          %v482 = vpack.c.bf16 %v481, %v480
          %v483 = vld [vmem:[%s4] sm:$0xf]
          %v484 = vld [vmem:[%s4 + $0x4] sm:$0xf]
          %v485 = vld [vmem:[%s4 + $0x8] sm:$0xf]
          %v486 = vld [vmem:[%s4 + $0xc] sm:$0xf]
          %v487 = vld [vmem:[%s4 + $0x10] sm:$0xf]
          %v488 = vld [vmem:[%s4 + $0x14] sm:$0xf]
          %v489 = vld [vmem:[%s4 + $0x18] sm:$0xf]
          %v490 = vld [vmem:[%s4 + $0x1c] sm:$0xf]
          %v491 = vld [vmem:[%s4 + $0x20] sm:$0xf]
          %v492 = vld [vmem:[%s4 + $0x24] sm:$0xf]
          %v493 = vld [vmem:[%s4 + $0x28] sm:$0xf]
          %v494 = vld [vmem:[%s4 + $0x2c] sm:$0xf]
          %v495 = vld [vmem:[%s4 + $0x30] sm:$0xf]
          %v496 = vld [vmem:[%s4 + $0x34] sm:$0xf]
          %v497 = vld [vmem:[%s4 + $0x38] sm:$0xf]
          %v498 = vld [vmem:[%s4 + $0x3c] sm:$0xf]
          %v499 = vld [vmem:[%s5] sm:$0x1]
          %v501 = vlaneseq
          %v502 = vshrl.u32 %v501, 7
          %v503 = vsub.s32 0, %v502
          %v504 = vrot.slane %v499, %v503
          %v522 = vunpack.c.l.b16 %v483
          %v523 = vunpack.c.l.b16 %v484
          %v524 = vunpack.c.l.b16 %v485
          %v525 = vunpack.c.l.b16 %v486
          %v526 = vunpack.c.l.b16 %v487
          %v527 = vunpack.c.l.b16 %v488
          %v528 = vunpack.c.l.b16 %v489
          %v529 = vunpack.c.l.b16 %v490
          %v530 = vunpack.c.l.b16 %v491
          %v531 = vunpack.c.l.b16 %v492
          %v532 = vunpack.c.l.b16 %v493
          %v533 = vunpack.c.l.b16 %v494
          %v534 = vunpack.c.l.b16 %v495
          %v535 = vunpack.c.l.b16 %v496
          %v536 = vunpack.c.l.b16 %v497
          %v537 = vunpack.c.l.b16 %v498
          %v538 = vpack.c.b16 %v523, %v522
          %v539 = vpack.c.b16 %v525, %v524
          %v540 = vpack.c.b16 %v527, %v526
          %v541 = vpack.c.b16 %v529, %v528
          %v542 = vpack.c.b16 %v531, %v530
          %v543 = vpack.c.b16 %v533, %v532
          %v544 = vpack.c.b16 %v535, %v534
          %v545 = vpack.c.b16 %v537, %v536
          %554 = vmatprep.subr.bf16.mxu0 0
          %555 = vmatpush1.bf16.msra.mxu0 %v545
          %556 = vmatprep.subr.bf16.mxu0 0
          %557 = vmatpush1.bf16.msra.mxu0 %v544
          %558 = vmatprep.subr.bf16.mxu0 0
          %559 = vmatpush1.bf16.msra.mxu0 %v543
          %560 = vmatprep.subr.bf16.mxu0 0
          %561 = vmatpush1.bf16.msra.mxu0 %v542
          %562 = vmatprep.subr.bf16.mxu0 0
          %563 = vmatpush1.bf16.msra.mxu0 %v541
          %564 = vmatprep.subr.bf16.mxu0 0
          %565 = vmatpush1.bf16.msra.mxu0 %v540
          %566 = vmatprep.subr.bf16.mxu0 0
          %567 = vmatpush1.bf16.msra.mxu0 %v539
          %568 = vmatprep.subr.bf16.mxu0 0
          %569 = vmatpush1.bf16.msra.mxu0 %v538
          %570 = vmatprep.subr.bf16.mxu0 0
          %571 = vmatpush2.bf16.msra.mxu0 0
          %572 = vmatprep.subr.bf16.mxu0 0
          %573 = vmatpush2.bf16.msra.mxu0 0
          %574 = vmatprep.subr.bf16.mxu0 0
          %575 = vmatpush2.bf16.msra.mxu0 0
          %576 = vmatprep.subr.bf16.mxu0 0
          %577 = vmatpush2.bf16.msra.mxu0 0
          %578 = vmatprep.subr.bf16.mxu0 0
          %579 = vmatpush2.bf16.msra.mxu0 0
          %580 = vmatprep.subr.bf16.mxu0 0
          %581 = vmatpush2.bf16.msra.mxu0 0
          %582 = vmatprep.subr.bf16.mxu0 0
          %583 = vmatpush2.bf16.msra.mxu0 0
          %584 = vmatprep.subr.bf16.mxu0 0
          %585 = vmatpush2.bf16.msra.mxu0 0
          %586 = vmatprep.mubr.bf16.mxu0 0
          %587 = vmatmul.mubr.bf16.gmra.mxu0 %v482
          %v588 = vpop.f32.mrf.mxu0
          %v589 = vadd.f32 %v504, %v588
          %v590 = vpop.f32.mrf.mxu0
          %v591 = vpop.f32.mrf.mxu0
          %v592 = vadd.f32 %v504, %v591
          %v593 = vpop.f32.mrf.mxu0
          %594 = vdwg.mxu0
          %v595 = vmul.f32 %v589, %v589
          %v596 = vmul.f32 %v592, %v592
          %vm597 = vcmask 130048
          %v598 = vsel %vm597, %v595, 0.0
          %599 = vadd.xlane.f32.xlu0 %v598
          %v600 = vpop.xlane.xlu0 %599
          %v601 = vsel %vm597, %v596, 0.0
          %602 = vadd.xlane.f32.xlu0 %v601
          %v603 = vpop.xlane.xlu0 %602
          %v604 = vmax.f32 %v600, 1e-24
          %v605 = vmax.f32 %v603, 1e-24
          %v606 = vrsqrt.pop %v604
          %v607 = vrsqrt.pop %v605
          %v608 = vmul.f32 %v589, %v606
          %v609 = vmul.f32 %v592, %v607
          %v610 = vpack.c.bf16 %v609, %v608
          %v612 = vunpack.c.l.b16 %v610
          %v613 = vunpack.c.h.b16 %v610
          %v614 = vpack.c.b16 %v612, %v612
          %v615 = vpack.c.b16 %v613, %v613
          %vm618 = vcmask 125952
          %619 = vst.msk [vmem:[%s259] sm:$0xf] %vm618, %v614
          %620 = vst.msk [vmem:[%s259 + $0x4] sm:$0xf] %vm618, %v615
        $region60: #{tpu_custom_call.1} parent=43 // pred_fallthru
          _
        %s621 = sand.u32 %s173, 1
        %s622 = scalar_lea.sflag [#allocation7], %s621
        %s623 = sand.u32 %s173, 1
        %s624 = smul.addr %s623, 8
        %s625 = scalar_lea.vmem [#allocation6], %s624
        // Predicated region
        $region61: #{tpu_custom_call.1} parent=43 // pred_check
          %p626 = pneg %p183
        $region62: #{tpu_custom_call.1} parent=43 // pred_check_branch
          %628 = sbr.rel (%p626) target = $region64
        $region63: #{tpu_custom_call.1} parent=43 // pred_region
          %s629 = smul.u32 %s25, %s24
          %s630 = smul.u32 2, %s629
          %s632 = ssub.s32 128, 128
          %633 = vsyncadd %s622, %s632
          %s634 = smul.addr %s630, 64
          %s635 = scalar_lea.hbm %s6, %s634
          %s636 = sshll.u32 %s625, 4
          %s637 = int_to_ptr.vmem [resolvable:$true] %s636
          %642 = dma.vmem_to_hbm [thread:$0]  %s637, 128, %s635, %s622, 64, 64, 4
        $region64: #{tpu_custom_call.1} parent=43 // pred_fallthru
          _
      $region44: #{tpu_custom_call.1} parent=5 // pred_fallthru
        _
      %p643 = scmp.le.s32.totalorder 2, %s15
      // Predicated region
      $region65: #{tpu_custom_call.1} parent=5 // pred_check
        %p644 = pneg %p643
      $region66: #{tpu_custom_call.1} parent=5 // pred_check_branch
        %646 = sbr.rel (%p644) target = $region68
      $region67: #{tpu_custom_call.1} parent=5 // pred_region
        %s647 = ssub.s32 %s15, 2
        // Predicated region
        $region69: #{tpu_custom_call.1} parent=67 // pred_check
          %p648 = pneg %p189
        $region70: #{tpu_custom_call.1} parent=67 // pred_check_branch
          %650 = sbr.rel (%p648) target = $region72
        $region71: #{tpu_custom_call.1} parent=67 // pred_region
          %s651 = sand.u32 %s174, 1
          %s652 = scalar_lea.sflag [#allocation7], %s651
          %s653 = sand.u32 %s174, 1
          %s654 = smul.addr %s653, 8
          %s655 = scalar_lea.vmem [#allocation6], %s654
          %656 = dma.done %s652, 128
        $region72: #{tpu_custom_call.1} parent=67 // pred_fallthru
          _
      $region68: #{tpu_custom_call.1} parent=5 // pred_fallthru
        _
    $region6: #{tpu_custom_call.1} parent=1 // loop_footer
      %s19 = sadd.s32 1, %s15
    $region7: #{tpu_custom_call.1} parent=1 // loop_footer_branch
      %14 = sbr.rel target = $region3
    $region8: #{tpu_custom_call.1} parent=1 // loop_exit
      _
    %657 = vsyncpa [#allocation7], 1
    %s658 = scalar_lea.sflag [#allocation7], 1
    %659 = vsyncpa %s658, 1

</llo_original>
